<compile_context>
chip_gen: v7x
topology: tpu7x:2x2x1
jax: 0.10.0
libtpu: 0.0.40
codegen_flags: <defaults>
</compile_context>

<pallas_src>
import functools

import jax
import jax.numpy as jnp
from jax import lax
from jax.experimental import pallas as pl
from jax.experimental.pallas import tpu as pltpu


_ONE_HOT_MAX_VOCAB = 2048     # above this, use the HBM row-gather path
_GATHER_RING_DEPTH = 8        # outstanding row DMAs in the gather path


def _vmem_capacity_bytes():
    """Best-effort per-core VMEM capacity (v5e/v6e: 128 MiB, v7x: 64 MiB)."""
    try:
        cap = int(pltpu.get_tpu_info().vmem_capacity_bytes)
        if cap > 0:
            return cap
    except Exception:
        pass
    return 64 << 20  # conservative default (v7x)


def _pick_tile_s(seq_len, cap):
    """Largest legal sequence tile: the full sequence if it fits under `cap`,
    otherwise the biggest lane/sublane-friendly divisor of seq_len <= cap."""
    if seq_len <= cap:
        return seq_len
    for cand in range((cap // 128) * 128, 0, -128):
        if seq_len % cand == 0:
            return cand
    for cand in range((cap // 8) * 8, 0, -8):
        if seq_len % cand == 0:
            return cand
    return seq_len


# --------------------------------------------------------------------------
# Path A: small vocab, VMEM-resident token table, one-hot gather on the MXU.
# --------------------------------------------------------------------------
def _resident_onehot_kernel(ids_ref, tok_tab_ref, pos_tab_ref, out_ref):
    """One grid step = one (batch row n, sequence tile s).

    ids_ref:     (TILE_S, N)   int32  token ids (transposed layout, lane-dense DMA)
    tok_tab_ref: (vocab, D)    table  VMEM-resident token embedding table
    pos_tab_ref: (TILE_S, D)   table  positional rows for this s tile
    out_ref:     (TILE_S, D)   output slab
    """
    n = pl.program_id(0)
    tile_s, nbatch = ids_ref.shape
    vocab = tok_tab_ref.shape[0]

    # Select column n of the ids block without dynamic lane slicing:
    # mask + lane reduction (cheap: TILE_S x N int32).
    ids_blk = ids_ref[...]                                               # (TILE_S, N)
    col_iota = lax.broadcasted_iota(jnp.int32, (tile_s, nbatch), 1)
    ids_col = jnp.sum(jnp.where(col_iota == n, ids_blk, 0),
                      axis=1, keepdims=True)                             # (TILE_S, 1)

    # One-hot gather on the MXU (only used for tiny vocab, see wrapper).
    vocab_iota = lax.broadcasted_iota(jnp.int32, (tile_s, vocab), 1)
    onehot = (ids_col == vocab_iota).astype(tok_tab_ref.dtype)           # (TILE_S, vocab)
    tok_emb = jnp.dot(onehot, tok_tab_ref[...],
                      preferred_element_type=jnp.float32)                # (TILE_S, D)

    out_ref[...] = (tok_emb
                    + pos_tab_ref[...].astype(jnp.float32)).astype(out_ref.dtype)


def _forward_resident(x_ids, token_table, pos_table, out_dtype, cap_limit):
    N, S = x_ids.shape
    vocab, D = token_table.shape

    # Cap TILE_S so the (TILE_S, vocab) one-hot stays <= ~2 MiB.
    tile_cap = max(8, min(1024, (2 << 20) // max(4 * vocab, 4)))
    tile_s = _pick_tile_s(S, tile_cap)
    assert S % tile_s == 0
    grid = (N, S // tile_s)

    # Lane-dense ids layout: (S, N) so each (TILE_S, N) block is one dense DMA.
    ids_t = jnp.transpose(x_ids).astype(jnp.int32)

    itemsize_out = jnp.dtype(out_dtype).itemsize
    tok_bytes = vocab * D * token_table.dtype.itemsize
    pos_blk = tile_s * D * pos_table.dtype.itemsize
    ids_blk = tile_s * 128 * 4                      # lane-padded int32 block
    out_blk = tile_s * D * itemsize_out
    interm = 3 * tile_s * vocab * 4 + tile_s * D * 4
    est = 2 * tok_bytes + 2 * pos_blk + 2 * ids_blk + 2 * out_blk + interm + (4 << 20)
    vmem_limit = int(min(max(est, 16 << 20), cap_limit))

    def run(single_buffer_table):
        tok_kwargs = (dict(pipeline_mode=pl.Buffered(1))
                      if single_buffer_table else {})
        grid_spec = pltpu.PrefetchScalarGridSpec(
            num_scalar_prefetch=0,
            grid=grid,
            in_specs=[
                # ids for this s tile (all batch rows; column n picked in-kernel)
                pl.BlockSpec((tile_s, N), lambda n, s: (s, 0)),
                # full token table, VMEM-resident (constant block index)
                pl.BlockSpec((vocab, D), lambda n, s: (0, 0), **tok_kwargs),
                # positional rows for this s tile (direct add, no gather)
                pl.BlockSpec((tile_s, D), lambda n, s: (s, 0)),
            ],
            out_specs=pl.BlockSpec((None, tile_s, D), lambda n, s: (n, s, 0)),
        )
        return pl.pallas_call(
            _resident_onehot_kernel,
            grid_spec=grid_spec,
            out_shape=jax.ShapeDtypeStruct((N, S, D), out_dtype),
            compiler_params=pltpu.CompilerParams(
                dimension_semantics=("parallel", "parallel"),
                vmem_limit_bytes=vmem_limit,
            ),
        )(ids_t, token_table, pos_table)

    try:
        # Single-buffer the resident table (its index_map is constant).
        return run(True)
    except Exception:
        # pl.Buffered(1) not supported on this JAX version -> default buffering.
        return run(False)


# --------------------------------------------------------------------------
# Path B: large vocab, token table stays in HBM, manual-DMA row gather.
# --------------------------------------------------------------------------
def _hbm_gather_kernel(ids_ref, tok_hbm_ref, pos_tab_ref, out_ref,
                       tok_buf, sem, *, seq_len, ring):
    """One grid step = one (batch row n, sequence tile s).

    ids_ref:     (N*S,)      int32 SMEM (scalar-prefetched token ids, flat)
    tok_hbm_ref: (vocab, D)  token table, left in HBM (memory_space=pl.ANY)
    pos_tab_ref: (TILE_S, D) positional rows for this s tile (VMEM)
    out_ref:     (TILE_S, D) output slab
    tok_buf:     (TILE_S, D) VMEM scratch for gathered token rows
    sem:         (1,)        DMA semaphore shared by all row copies
    """
    n = pl.program_id(0)
    s = pl.program_id(1)
    rows, _ = out_ref.shape
    vocab = tok_hbm_ref.shape[0]
    base = n * seq_len + s * rows   # flat index of the first token of this tile

    def row_copy(r):
        raw = ids_ref[base + r]
        # Defensive clamp: torch.nn.Embedding would raise on OOB ids; here we
        # clamp so a bad id cannot trigger a DMA bounds fault.
        tok_id = jnp.minimum(jnp.maximum(raw, 0), vocab - 1)
        return pltpu.make_async_copy(tok_hbm_ref.at[tok_id],
                                     tok_buf.at[r], sem.at[0])

    def row_wait():
        # All row copies have identical size; a size-matched wait on the shared
        # semaphore is sufficient (completion order does not matter -- we only
        # read tok_buf after all `rows` waits have retired).
        pltpu.make_async_copy(tok_hbm_ref.at[0], tok_buf.at[0], sem.at[0]).wait()

    k = min(ring, rows)
    for r in range(k):              # prime the DMA ring (static unroll)
        row_copy(r).start()

    def body(r, carry):
        row_wait()
        @pl.when(r + k < rows)
        def _():
            row_copy(r + k).start()
        return carry

    lax.fori_loop(0, rows, body, 0)

    out_ref[...] = (tok_buf[...].astype(jnp.float32)
                    + pos_tab_ref[...].astype(jnp.float32)).astype(out_ref.dtype)


def _forward_hbm_gather(x_ids, token_table, pos_table, out_dtype, cap_limit):
    N, S = x_ids.shape
    vocab, D = token_table.shape

    tile_s = _pick_tile_s(S, 1024)
    assert S % tile_s == 0
    grid = (N, S // tile_s)

    ids_flat = x_ids.reshape(-1).astype(jnp.int32)

    out_blk = tile_s * D * jnp.dtype(out_dtype).itemsize
    pos_blk = tile_s * D * pos_table.dtype.itemsize
    buf_bytes = tile_s * D * token_table.dtype.itemsize
    est = buf_bytes + 2 * (out_blk + pos_blk) + (4 << 20)
    vmem_limit = int(min(max(est, 16 << 20), cap_limit))

    kernel = functools.partial(_hbm_gather_kernel,
                               seq_len=S, ring=_GATHER_RING_DEPTH)

    grid_spec = pltpu.PrefetchScalarGridSpec(
        num_scalar_prefetch=1,          # ids -> SMEM, drives the row gather
        grid=grid,
        in_specs=[
            pl.BlockSpec(memory_space=pl.ANY),                    # token table in HBM
            pl.BlockSpec((tile_s, D), lambda n, s, ids: (s, 0)),  # positional rows
        ],
        out_specs=pl.BlockSpec((None, tile_s, D), lambda n, s, ids: (n, s, 0)),
        scratch_shapes=[
            pltpu.VMEM((tile_s, D), token_table.dtype),
            pltpu.SemaphoreType.DMA((1,)),
        ],
    )
    return pl.pallas_call(
        kernel,
        grid_spec=grid_spec,
        out_shape=jax.ShapeDtypeStruct((N, S, D), out_dtype),
        compiler_params=pltpu.CompilerParams(
            dimension_semantics=("parallel", "parallel"),
            vmem_limit_bytes=vmem_limit,
        ),
    )(ids_flat, token_table, pos_table)


# --------------------------------------------------------------------------
# Public wrapper (matches TokenAndPositionalEmbedding.forward).
# --------------------------------------------------------------------------
def token_and_positional_embedding(x_ids, token_table, pos_table):
    """x_ids: (N, S) int; token_table: (vocab, D); pos_table: (max_len, D)."""
    N, S = x_ids.shape
    vocab, D = token_table.shape
    max_len, D2 = pos_table.shape
    assert D == D2, "token/positional embedding dims must match"
    assert S <= max_len, "seq_len must be <= max_len"

    out_dtype = jnp.promote_types(token_table.dtype, pos_table.dtype)
    capacity = _vmem_capacity_bytes()
    cap_limit = int(capacity * 0.85)

    tok_bytes = vocab * D * token_table.dtype.itemsize
    use_resident = (vocab <= _ONE_HOT_MAX_VOCAB
                    and (2 * tok_bytes + (8 << 20)) <= int(0.8 * capacity))

    if use_resident:
        return _forward_resident(x_ids, token_table, pos_table, out_dtype, cap_limit)
    return _forward_hbm_gather(x_ids, token_table, pos_table, out_dtype, cap_limit)


if __name__ == "__main__":
    key = jax.random.PRNGKey(0)

    def check(vocab_size, d_model, max_len, batch, seq_len, key):
        k_tok, k_pos, k_ids = jax.random.split(key, 3)
        token_table = jax.random.normal(k_tok, (vocab_size, d_model), dtype=jnp.float32)
        pos_table = jax.random.normal(k_pos, (max_len, d_model), dtype=jnp.float32)
        x_ids = jax.random.randint(k_ids, (batch, seq_len), 0, vocab_size,
                                   dtype=jnp.int32)
        out = jax.block_until_ready(
            token_and_positional_embedding(x_ids, token_table, pos_table))
        ref = jnp.take(token_table, x_ids, axis=0) + pos_table[:seq_len][None, :, :]
        assert out.shape == (batch, seq_len, d_model)
        assert jnp.allclose(out, ref, atol=1e-5, rtol=1e-5), "mismatch vs reference"

    k1, k2 = jax.random.split(key)
    # Small vocab -> VMEM-resident table + one-hot MXU gather path.
    check(vocab_size=64, d_model=128, max_len=16, batch=2, seq_len=8, key=k1)
    # Larger vocab -> HBM table + SMEM ids + manual-DMA row-gather path.
    check(vocab_size=4096, d_model=128, max_len=256, batch=2, seq_len=128, key=k2)

    print("KERNEL_OK")
</pallas_src>

<mosaic_0001>
module attributes {stable_mosaic.version = 11 : i64} {
  func.func @_resident_onehot_kernel(%arg0: i32, %arg1: i32, %arg2: memref<8x2xi32, #tpu.memory_space<vmem>>, %arg3: memref<64x128xf32, #tpu.memory_space<vmem>>, %arg4: memref<8x128xf32, #tpu.memory_space<vmem>>, %arg5: memref<1x8x128xf32, #tpu.memory_space<vmem>>) attributes {dimension_semantics = [#tpu.dimension_semantics<parallel>, #tpu.dimension_semantics<parallel>], iteration_bounds = array<i64: 2, 1>, scalar_prefetch = 0 : i64, scratch_operands = 0 : i64, tpu.core_type = #tpu.core_type<tc>, window_params = [{transform_indices = @transform_0, window_bounds = array<i64: 8, 2>}, {pipeline_mode = #tpu.pipeline_mode<synchronous>, transform_indices = @transform_1, window_bounds = array<i64: 64, 128>}, {transform_indices = @transform_2, window_bounds = array<i64: 8, 128>}, {transform_indices = @transform_3, window_bounds = array<i64: 1, 8, 128>}]} {
    %c0 = arith.constant 0 : index
    %c0_0 = arith.constant 0 : index
    %0 = vector.load %arg2[%c0, %c0_0] : memref<8x2xi32, #tpu.memory_space<vmem>>, vector<8x2xi32>
    %1 = tpu.iota {dimensions = array<i32: 1>} : vector<8x2xi32>
    %2 = vector.broadcast %arg0 : i32 to vector<8x2xi32>
    %3 = arith.cmpi eq, %1, %2 : vector<8x2xi32>
    %c0_i32 = arith.constant 0 : i32
    %4 = vector.broadcast %c0_i32 : i32 to vector<8x2xi32>
    %5 = arith.select %3, %0, %4 : vector<8x2xi1>, vector<8x2xi32>
    %cst = arith.constant dense<0> : vector<8xi32>
    %6 = vector.multi_reduction <add>, %5, %cst [1] : vector<8x2xi32> to vector<8xi32>
    %7 = vector.shape_cast %6 : vector<8xi32> to vector<8x1xi32>
    %8 = tpu.iota {dimensions = array<i32: 1>} : vector<8x64xi32>
    %9 = vector.broadcast %7 : vector<8x1xi32> to vector<8x64xi32>
    %10 = arith.cmpi eq, %9, %8 : vector<8x64xi32>
    %11 = arith.extui %10 : vector<8x64xi1> to vector<8x64xi32>
    %12 = arith.sitofp %11 : vector<8x64xi32> to vector<8x64xf32>
    %c0_1 = arith.constant 0 : index
    %c0_2 = arith.constant 0 : index
    %13 = vector.load %arg3[%c0_1, %c0_2] : memref<64x128xf32, #tpu.memory_space<vmem>>, vector<64x128xf32>
    %cst_3 = arith.constant dense<0.000000e+00> : vector<8x128xf32>
    %14 = tpu.matmul %12, %13, %cst_3 {dimension_numbers = #tpu.dot_dimension_numbers<[1], [0], [0], [1], [0, 0, 1, 1], [], []>} : vector<8x64xf32>, vector<64x128xf32>, vector<8x128xf32> -> vector<8x128xf32>
    %c0_4 = arith.constant 0 : index
    %c0_5 = arith.constant 0 : index
    %15 = vector.load %arg4[%c0_4, %c0_5] : memref<8x128xf32, #tpu.memory_space<vmem>>, vector<8x128xf32>
    %16 = arith.addf %14, %15 : vector<8x128xf32>
    %c0_6 = arith.constant 0 : index
    %c0_7 = arith.constant 0 : index
    %c0_8 = arith.constant 0 : index
    %17 = vector.load %arg5[%c0_6, %c0_7, %c0_8] : memref<1x8x128xf32, #tpu.memory_space<vmem>>, vector<1x8x128xf32>
    %18 = vector.shape_cast %17 : vector<1x8x128xf32> to vector<8x128xf32>
    %19 = vector.shape_cast %16 : vector<8x128xf32> to vector<1x8x128xf32>
    tpu.vector_store %arg5[%c0_6, %c0_7, %c0_8], %19 {strides = array<i32>} : memref<1x8x128xf32, #tpu.memory_space<vmem>>, vector<1x8x128xf32>,
    return
  }
  func.func @transform_0(%arg0: i32, %arg1: i32) -> (i32, i32) {
    %c0_i32 = arith.constant 0 : i32
    %c0_i32_0 = arith.constant 0 : i32
    return %arg1, %c0_i32 : i32, i32
  }
  func.func @transform_1(%arg0: i32, %arg1: i32) -> (i32, i32) {
    %c0_i32 = arith.constant 0 : i32
    %c0_i32_0 = arith.constant 0 : i32
    %c0_i32_1 = arith.constant 0 : i32
    return %c0_i32, %c0_i32_0 : i32, i32
  }
  func.func @transform_2(%arg0: i32, %arg1: i32) -> (i32, i32) {
    %c0_i32 = arith.constant 0 : i32
    %c0_i32_0 = arith.constant 0 : i32
    return %arg1, %c0_i32 : i32, i32
  }
  func.func @transform_3(%arg0: i32, %arg1: i32) -> (i32, i32, i32) {
    %c0_i32 = arith.constant 0 : i32
    %c0_i32_0 = arith.constant 0 : i32
    return %arg0, %arg1, %c0_i32 : i32, i32, i32
  }
}

module attributes {stable_mosaic.version = 11 : i64} {
  func.func @_resident_onehot_kernel(%arg0: i32, %arg1: i32, %arg2: memref<8x2xi32, #tpu.memory_space<vmem>>, %arg3: memref<64x128xf32, #tpu.memory_space<vmem>>, %arg4: memref<8x128xf32, #tpu.memory_space<vmem>>, %arg5: memref<1x8x128xf32, #tpu.memory_space<vmem>>) attributes {dimension_semantics = [#tpu.dimension_semantics<parallel>, #tpu.dimension_semantics<parallel>], iteration_bounds = array<i64: 2, 1>, scalar_prefetch = 0 : i64, scratch_operands = 0 : i64, tpu.core_type = #tpu.core_type<tc>, window_params = [{transform_indices = @transform_0, window_bounds = array<i64: 8, 2>}, {pipeline_mode = #tpu.pipeline_mode<synchronous>, transform_indices = @transform_1, window_bounds = array<i64: 64, 128>}, {transform_indices = @transform_2, window_bounds = array<i64: 8, 128>}, {transform_indices = @transform_3, window_bounds = array<i64: 1, 8, 128>}]} {
    %c0 = arith.constant 0 : index
    %c0_0 = arith.constant 0 : index
    %0 = vector.load %arg2[%c0, %c0_0] : memref<8x2xi32, #tpu.memory_space<vmem>>, vector<8x2xi32>
    %1 = tpu.iota {dimensions = array<i32: 1>} : vector<8x2xi32>
    %2 = vector.broadcast %arg0 : i32 to vector<8x2xi32>
    %3 = arith.cmpi eq, %1, %2 : vector<8x2xi32>
    %c0_i32 = arith.constant 0 : i32
    %4 = vector.broadcast %c0_i32 : i32 to vector<8x2xi32>
    %5 = arith.select %3, %0, %4 : vector<8x2xi1>, vector<8x2xi32>
    %cst = arith.constant dense<0> : vector<8xi32>
    %6 = vector.multi_reduction <add>, %5, %cst [1] : vector<8x2xi32> to vector<8xi32>
    %7 = vector.shape_cast %6 : vector<8xi32> to vector<8x1xi32>
    %8 = tpu.iota {dimensions = array<i32: 1>} : vector<8x64xi32>
    %9 = vector.broadcast %7 : vector<8x1xi32> to vector<8x64xi32>
    %10 = arith.cmpi eq, %9, %8 : vector<8x64xi32>
    %11 = arith.extui %10 : vector<8x64xi1> to vector<8x64xi32>
    %12 = arith.sitofp %11 : vector<8x64xi32> to vector<8x64xf32>
    %c0_1 = arith.constant 0 : index
    %c0_2 = arith.constant 0 : index
    %13 = vector.load %arg3[%c0_1, %c0_2] : memref<64x128xf32, #tpu.memory_space<vmem>>, vector<64x128xf32>
    %cst_3 = arith.constant dense<0.000000e+00> : vector<8x128xf32>
    %14 = tpu.matmul %12, %13, %cst_3 {dimension_numbers = #tpu.dot_dimension_numbers<[1], [0], [0], [1], [0, 0, 1, 1], [], []>} : vector<8x64xf32>, vector<64x128xf32>, vector<8x128xf32> -> vector<8x128xf32>
    %c0_4 = arith.constant 0 : index
    %c0_5 = arith.constant 0 : index
    %15 = vector.load %arg4[%c0_4, %c0_5] : memref<8x128xf32, #tpu.memory_space<vmem>>, vector<8x128xf32>
    %16 = arith.addf %14, %15 : vector<8x128xf32>
    %c0_6 = arith.constant 0 : index
    %c0_7 = arith.constant 0 : index
    %c0_8 = arith.constant 0 : index
    %17 = vector.load %arg5[%c0_6, %c0_7, %c0_8] : memref<1x8x128xf32, #tpu.memory_space<vmem>>, vector<1x8x128xf32>
    %18 = vector.shape_cast %17 : vector<1x8x128xf32> to vector<8x128xf32>
    %19 = vector.shape_cast %16 : vector<8x128xf32> to vector<1x8x128xf32>
    tpu.vector_store %arg5[%c0_6, %c0_7, %c0_8], %19 {strides = array<i32>} : memref<1x8x128xf32, #tpu.memory_space<vmem>>, vector<1x8x128xf32>,
    return
  }
  func.func @transform_0(%arg0: i32, %arg1: i32) -> (i32, i32) {
    %c0_i32 = arith.constant 0 : i32
    %c0_i32_0 = arith.constant 0 : i32
    return %arg1, %c0_i32 : i32, i32
  }
  func.func @transform_1(%arg0: i32, %arg1: i32) -> (i32, i32) {
    %c0_i32 = arith.constant 0 : i32
    %c0_i32_0 = arith.constant 0 : i32
    %c0_i32_1 = arith.constant 0 : i32
    return %c0_i32, %c0_i32_0 : i32, i32
  }
  func.func @transform_2(%arg0: i32, %arg1: i32) -> (i32, i32) {
    %c0_i32 = arith.constant 0 : i32
    %c0_i32_0 = arith.constant 0 : i32
    return %arg1, %c0_i32 : i32, i32
  }
  func.func @transform_3(%arg0: i32, %arg1: i32) -> (i32, i32, i32) {
    %c0_i32 = arith.constant 0 : i32
    %c0_i32_0 = arith.constant 0 : i32
    return %arg0, %arg1, %c0_i32 : i32, i32, i32
  }
}

</mosaic_0001>

<llo_original>
// kernel: tpu_custom_call.1
$region0: #{tpu_custom_call.1}
  #allocation0 [shape = 'u32[]', space=smem, size = 0x4, offset = 0x4, fixed_abs, tag = 'smem constant byte address 0x4 - core index']
  #allocation1 [shape = 'u32[144,128]{1,0:T(1,128)}', space=vmem, size = 0x12000, scoped, tag = 'internal scratch']
  %s0 = inlined_call_operand.vmem [shape: s32[8,2], index: 0, kind: input, shape index: {}]
  %s1 = inlined_call_operand.hbm [shape: f32[64,128], index: 1, kind: input, shape index: {}]
  %s2 = inlined_call_operand.vmem [shape: f32[16,128], index: 2, kind: input, shape index: {}]
  %s3 = inlined_call_operand.hbm [shape: f32[2,8,128], index: 3, kind: output, shape index: {}]
  %s4 = sld [smem:[#allocation0]]
  $region49: #{tpu_custom_call.1} parent=0
    _
  %s6 = ssub.s32 1, %s4
  %s7 = scalar_select 0, %s6, %s4
  $region1: #{tpu_custom_call.1} parent=0
    #allocation2 [shape = 'u8[32768]{0}', space=vmem, size = 0x8000, scoped, tag = 'input window, operand 1, single buffered']
    #allocation3 [shape = 's32[2]{0}', space=sflag, size = 0x8, scoped, tag = 'scoped memory for tpu_custom_call.1']
    #allocation4 [shape = 's32[2]{0}', space=sflag, size = 0x8, scoped, tag = 'scoped memory for tpu_custom_call.1']
    #allocation5 [shape = 'u8[8192]{0}', space=vmem, size = 0x2000, scoped, tag = 'output window, operand 0']
    %8 = vsyncpa [#allocation3], 0
    %9 = vsyncpa [#allocation4], 0
    %s10 = scalar_lea.sflag [#allocation4], 1
    %11 = vsyncpa %s10, 0
    loop: start=0, step=1, limit=4
    $region2: #{tpu_custom_call.1} parent=1 // loop_pre_header
      _
    $region3: #{tpu_custom_call.1} parent=1 // loop_header
      %s13 = sphi 0, %s17
      %p14 = scmp.ge.s32.totalorder %s13, 4
      %s20 = sphi 0, %s32
      %s21 = sphi 0, %s28
      %s22 = sphi 0, %s20
      %s23 = sphi 0, %s21
      %s24 = sphi 0, %s22
      %s25 = sphi 0, %s23
      %s35 = sphi 0, %s37
      %s38 = sphi 0, %s35
      %s39 = sphi 0, %s38
      %s55 = sphi 0, %s39
      %s59 = sphi 0, %s59
      %s61 = sphi 0, %s59
      %s62 = sphi 0, %s61
      %s76 = sphi 0, %s62
      %s82 = sphi 0, %s84
      %s85 = sphi 0, %s82
      %s86 = sphi 0, %s85
      %s102 = sphi 0, %s86
      %s110 = sphi 0, %s112
      %s113 = sphi 0, %s110
      %s114 = sphi 0, %s113
      %s130 = sphi 0, %s114
    $region4: #{tpu_custom_call.1} parent=1 // loop_header_branch
      %16 = sbr.rel (%p14) target = $region8
    $region5: #{tpu_custom_call.1} parent=1 // loop_body
      %s18 = ssub.s32 %s13, 1
      %s19 = ssub.s32 %s13, 2
      %s26 = sadd.s32 1, %s21
      %p27 = scmp.ge.s32.totalorder %s26, 1
      %s28 = scalar_select %p27, 0, %s26
      %s29 = sadd.s32 1, %s20
      %s30 = scalar_select %p27, %s29, %s20
      %p31 = scmp.ge.s32.totalorder %s30, 2
      %s32 = scalar_select %p31, 0, %s30
      %s33 = ssub.s32 %s21, %s28
      %p34 = scmp.eq.s32.totalorder %s33, 0
      %s36 = sadd.s32 %s35, 1
      %s37 = scalar_select %p34, %s35, %s36
      %p40 = pneg %p34
      %p41 = scmp.eq.s32.totalorder %s13, 1
      %p42 = por %p40, %p41
      %p43 = scmp.ne.s32.totalorder %s35, %s38
      %p44 = scmp.eq.s32.totalorder %s13, 0
      %p45 = por %p43, %p44
      %p46 = scmp.ne.s32.totalorder %s35, %s38
      %p47 = scmp.eq.s32.totalorder %s18, 1
      %p48 = por %p46, %p47
      %p49 = scmp.ne.s32.totalorder %s38, %s39
      %p50 = scmp.eq.s32.totalorder %s18, 0
      %p51 = por %p49, %p50
      %p52 = scmp.ne.s32.totalorder %s38, %s39
      %p53 = scmp.eq.s32.totalorder %s19, 1
      %p54 = por %p52, %p53
      %p56 = scmp.ne.s32.totalorder %s39, %s55
      %p57 = scmp.eq.s32.totalorder %s19, 0
      %p58 = por %p56, %p57
      %s60 = sadd.s32 %s59, 1
      %p63 = scmp.eq.s32.totalorder %s13, 1
      %p64 = scmp.ne.s32.totalorder %s59, %s61
      %p65 = scmp.eq.s32.totalorder %s13, 0
      %p66 = por %p64, %p65
      %p67 = scmp.ne.s32.totalorder %s59, %s61
      %p68 = scmp.eq.s32.totalorder %s18, 1
      %p69 = por %p67, %p68
      %p70 = scmp.ne.s32.totalorder %s61, %s62
      %p71 = scmp.eq.s32.totalorder %s18, 0
      %p72 = por %p70, %p71
      %p73 = scmp.ne.s32.totalorder %s61, %s62
      %p74 = scmp.eq.s32.totalorder %s19, 1
      %p75 = por %p73, %p74
      %p77 = scmp.ne.s32.totalorder %s62, %s76
      %p78 = scmp.eq.s32.totalorder %s19, 0
      %p79 = por %p77, %p78
      %s80 = ssub.s32 %s21, %s28
      %p81 = scmp.eq.s32.totalorder %s80, 0
      %s83 = sadd.s32 %s82, 1
      %s84 = scalar_select %p81, %s82, %s83
      %p87 = pneg %p81
      %p88 = scmp.eq.s32.totalorder %s13, 1
      %p89 = por %p87, %p88
      %p90 = scmp.ne.s32.totalorder %s82, %s85
      %p91 = scmp.eq.s32.totalorder %s13, 0
      %p92 = por %p90, %p91
      %p93 = scmp.ne.s32.totalorder %s82, %s85
      %p94 = scmp.eq.s32.totalorder %s18, 1
      %p95 = por %p93, %p94
      %p96 = scmp.ne.s32.totalorder %s85, %s86
      %p97 = scmp.eq.s32.totalorder %s18, 0
      %p98 = por %p96, %p97
      %p99 = scmp.ne.s32.totalorder %s85, %s86
      %p100 = scmp.eq.s32.totalorder %s19, 1
      %p101 = por %p99, %p100
      %p103 = scmp.ne.s32.totalorder %s86, %s102
      %p104 = scmp.eq.s32.totalorder %s19, 0
      %p105 = por %p103, %p104
      %s106 = ssub.s32 %s20, %s32
      %s107 = ssub.s32 %s21, %s28
      %s108 = sor.u32 %s106, %s107
      %p109 = scmp.eq.s32.totalorder %s108, 0
      %s111 = sadd.s32 %s110, 1
      %s112 = scalar_select %p109, %s110, %s111
      %p115 = pneg %p109
      %p116 = scmp.eq.s32.totalorder %s13, 1
      %p117 = por %p115, %p116
      %p118 = scmp.ne.s32.totalorder %s110, %s113
      %p119 = scmp.eq.s32.totalorder %s13, 0
      %p120 = por %p118, %p119
      %p121 = scmp.ne.s32.totalorder %s110, %s113
      %p122 = scmp.eq.s32.totalorder %s18, 1
      %p123 = por %p121, %p122
      %p124 = scmp.ne.s32.totalorder %s113, %s114
      %p125 = scmp.eq.s32.totalorder %s18, 0
      %p126 = por %p124, %p125
      %p127 = scmp.ne.s32.totalorder %s113, %s114
      %p128 = scmp.eq.s32.totalorder %s19, 1
      %p129 = por %p127, %p128
      %p131 = scmp.ne.s32.totalorder %s114, %s130
      %p132 = scmp.eq.s32.totalorder %s19, 0
      %p133 = por %p131, %p132
      %p134 = scmp.le.s32.totalorder 1, %s13
      %p135 = scmp.lt.s32.totalorder %s13, 3
      %p136 = pnand %p134, %p135
      %p137 = pneg %p136
      // Predicated region
      $region9: #{tpu_custom_call.1} parent=5 // pred_check
        _
      $region10: #{tpu_custom_call.1} parent=5 // pred_check_branch
        %139 = sbr.rel (%p136) target = $region12
      $region11: #{tpu_custom_call.1} parent=5 // pred_region
        %s140 = ssub.s32 %s13, 1
        // Predicated region
        $region13: #{tpu_custom_call.1} parent=11 // pred_check
          %p141 = pneg %p51
        $region14: #{tpu_custom_call.1} parent=11 // pred_check_branch
          %143 = sbr.rel (%p141) target = $region16
        $region15: #{tpu_custom_call.1} parent=11 // pred_region
          %p144 = scmp.lt.s32.totalorder %s23, 0
          %s145 = scalar_select %p144, %s23, 0
          %s146 = smul.addr %s145, 8
          %s147 = scalar_lea.vmem %s0, %s146
        $region16: #{tpu_custom_call.1} parent=11 // pred_fallthru
          _
        // Predicated region
        $region17: #{tpu_custom_call.1} parent=11 // pred_check
          %p148 = pneg %p72
        $region18: #{tpu_custom_call.1} parent=11 // pred_check_branch
          %150 = sbr.rel (%p148) target = $region20
        $region19: #{tpu_custom_call.1} parent=11 // pred_region
          %s152 = ssub.s32 1024, 1024
          %153 = vsyncadd [#allocation3], %s152
          %s154 = sshll.u32 [#allocation2], 4
          %s155 = int_to_ptr.vmem [resolvable:$true] %s154
          %160 = dma.hbm_to_vmem [thread:$0]  %s1, 1024, %s155, [#allocation3], 128, 128, 8
        $region20: #{tpu_custom_call.1} parent=11 // pred_fallthru
          _
        // Predicated region
        $region21: #{tpu_custom_call.1} parent=11 // pred_check
          %p161 = pneg %p98
        $region22: #{tpu_custom_call.1} parent=11 // pred_check_branch
          %163 = sbr.rel (%p161) target = $region24
        $region23: #{tpu_custom_call.1} parent=11 // pred_region
          %p164 = scmp.lt.s32.totalorder %s23, 1
          %s165 = scalar_select %p164, %s23, 1
          %s166 = smul.addr %s165, 8
          %s167 = scalar_lea.vmem %s2, %s166
        $region24: #{tpu_custom_call.1} parent=11 // pred_fallthru
          _
      $region12: #{tpu_custom_call.1} parent=5 // pred_fallthru
        _
      %p168 = scmp.lt.s32.totalorder %s13, 2
      // Predicated region
      $region25: #{tpu_custom_call.1} parent=5 // pred_check
        %p169 = pneg %p168
      $region26: #{tpu_custom_call.1} parent=5 // pred_check_branch
        %171 = sbr.rel (%p169) target = $region28
      $region27: #{tpu_custom_call.1} parent=5 // pred_region
        _
      $region28: #{tpu_custom_call.1} parent=5 // pred_fallthru
        _
      %p172 = scmp.le.s32.totalorder 1, %s13
      %p173 = scmp.lt.s32.totalorder %s13, 3
      %p174 = pnand %p172, %p173
      %p175 = pneg %p174
      // Predicated region
      $region29: #{tpu_custom_call.1} parent=5 // pred_check
        _
      $region30: #{tpu_custom_call.1} parent=5 // pred_check_branch
        %177 = sbr.rel (%p174) target = $region32
      $region31: #{tpu_custom_call.1} parent=5 // pred_region
        %s178 = ssub.s32 %s13, 1
        // Predicated region
        $region33: #{tpu_custom_call.1} parent=31 // pred_check
          %p179 = pneg %p72
        $region34: #{tpu_custom_call.1} parent=31 // pred_check_branch
          %181 = sbr.rel (%p179) target = $region36
        $region35: #{tpu_custom_call.1} parent=31 // pred_region
          %182 = dma.done [#allocation3], 1024
        $region36: #{tpu_custom_call.1} parent=31 // pred_fallthru
          _
        %p183 = scmp.lt.s32.totalorder %s23, 0
        %s184 = scalar_select %p183, %s23, 0
        %s185 = smul.addr %s184, 8
        %s186 = scalar_lea.vmem %s0, %s185
        %p187 = pneg %p51
        %p188 = pneg %p48
        %p189 = pneg %p72
        %p190 = pneg %p69
        %p191 = scmp.lt.s32.totalorder %s23, 1
        %s192 = scalar_select %p191, %s23, 1
        %s193 = smul.addr %s192, 8
        %s194 = scalar_lea.vmem %s2, %s193
        %p195 = pneg %p98
        %p196 = pneg %p95
        %p197 = pneg %p126
        %p198 = pneg %p123
        %s199 = sand.u32 %s113, 1
        %s200 = scalar_lea.sflag [#allocation4], %s199
        %s201 = sand.u32 %s113, 1
        %s202 = smul.addr %s201, 8
        %s203 = scalar_lea.vmem [#allocation5], %s202
        %p204 = scmp.lt.s32.totalorder %s23, 0
        %s205 = scalar_select %p204, %s23, 0
        %s206 = smul.addr %s205, 8
        %s207 = scalar_lea.vmem %s0, %s206
        %p208 = scmp.lt.s32.totalorder %s23, 1
        %s209 = scalar_select %p208, %s23, 1
        %s210 = smul.addr %s209, 8
        %s211 = scalar_lea.vmem %s2, %s210
        %v212 = vld [vmem:[%s207] sm:$0xff]
        %v213 = vlaneseq
        %v214 = vand.u32 %v213, 127
        %v215 = vstv %s22
        %vm216 = vcmp.eq.s32.totalorder %v214, %v215
        %v217 = vsel %vm216, %v212, 0
        %vm218 = vcmask 15360
        %v219 = vsel %vm218, %v217, 0
        %v220 = vand.u32 %v219, 65535
        %v221 = vshrl.u32 %v219, 16
        %v222 = vcvt.s32.f32 %v220
        %v223 = vcvt.s32.f32 %v221
        %224 = vadd.xlane.f32.xlu0 %v222
        %v225 = vpop.xlane.xlu0 %224
        %226 = vadd.xlane.f32.xlu0 %v223
        %v227 = vpop.xlane.xlu0 %226
        %v228 = vcvt.f32.s32 %v225
        %v229 = vcvt.f32.s32 %v227
        %v230 = vshll.u32 %v229, 16
        %v231 = vadd.s32 %v230, %v228
        %vm232 = vcmp.eq.s32.totalorder %v231, %v214
        %v233 = vsel %vm232, 1, 0
        %v234 = vcvt.s32.f32 %v233
        %v235 = vld [vmem:[#allocation2] sm:$0xff]
        %v236 = vld [vmem:[#allocation2 + $0x8] sm:$0xff]
        %v237 = vld [vmem:[#allocation2 + $0x10] sm:$0xff]
        %v238 = vld [vmem:[#allocation2 + $0x18] sm:$0xff]
        %v239 = vld [vmem:[#allocation2 + $0x20] sm:$0xff]
        %v240 = vld [vmem:[#allocation2 + $0x28] sm:$0xff]
        %v241 = vld [vmem:[#allocation2 + $0x30] sm:$0xff]
        %v242 = vld [vmem:[#allocation2 + $0x38] sm:$0xff]
        %v243 = vld [vmem:[%s211] sm:$0xff]
        %vm244 = vcmask 523264
        %v246 = vsel %vm244, %v234, 0
        %248 = vmatprep.subr.mxu0 0.0
        %249 = vmatpush1.msra.mxu0 %v235
        %250 = vmatprep.subr.mxu0 0.0
        %251 = vmatpush1.msra.mxu0 %v236
        %252 = vmatprep.subr.mxu0 0.0
        %253 = vmatpush1.msra.mxu0 %v237
        %254 = vmatprep.subr.mxu0 0.0
        %255 = vmatpush1.msra.mxu0 %v238
        %256 = vmatprep.subr.mxu0 0.0
        %257 = vmatpush1.msra.mxu0 %v239
        %258 = vmatprep.subr.mxu0 0.0
        %259 = vmatpush1.msra.mxu0 %v240
        %260 = vmatprep.subr.mxu0 0.0
        %261 = vmatpush1.msra.mxu0 %v241
        %262 = vmatprep.subr.mxu0 0.0
        %263 = vmatpush1.msra.mxu0 %v242
        %264 = vmatprep.subr.mxu0 0.0
        %265 = vmatpush1.msra.mxu0 0.0
        %266 = vmatprep.subr.mxu0 0.0
        %267 = vmatpush1.msra.mxu0 0.0
        %268 = vmatprep.subr.mxu0 0.0
        %269 = vmatpush1.msra.mxu0 0.0
        %270 = vmatprep.subr.mxu0 0.0
        %271 = vmatpush1.msra.mxu0 0.0
        %272 = vmatprep.subr.mxu0 0.0
        %273 = vmatpush1.msra.mxu0 0.0
        %274 = vmatprep.subr.mxu0 0.0
        %275 = vmatpush1.msra.mxu0 0.0
        %276 = vmatprep.subr.mxu0 0.0
        %277 = vmatpush1.msra.mxu0 0.0
        %278 = vmatprep.subr.mxu0 0.0
        %279 = vmatpush1.msra.mxu0 0.0
        %280 = vmatprep.subr.mxu0 0.0
        %281 = vmatpush1.msra.mxu0 0.0
        %282 = vmatprep.subr.mxu0 0.0
        %283 = vmatpush1.msra.mxu0 0.0
        %284 = vmatprep.subr.mxu0 0.0
        %285 = vmatpush1.msra.mxu0 0.0
        %286 = vmatprep.subr.mxu0 0.0
        %287 = vmatpush1.msra.mxu0 0.0
        %288 = vmatprep.subr.mxu0 0.0
        %289 = vmatpush1.msra.mxu0 0.0
        %290 = vmatprep.subr.mxu0 0.0
        %291 = vmatpush1.msra.mxu0 0.0
        %292 = vmatprep.subr.mxu0 0.0
        %293 = vmatpush1.msra.mxu0 0.0
        %294 = vmatprep.subr.mxu0 0.0
        %295 = vmatpush1.msra.mxu0 0.0
        %296 = vmatprep.subr.mxu0 0.0
        %297 = vmatpush1.msra.mxu0 0.0
        %298 = vmatprep.subr.mxu0 0.0
        %299 = vmatpush1.msra.mxu0 0.0
        %300 = vmatprep.subr.mxu0 0.0
        %301 = vmatpush1.msra.mxu0 0.0
        %302 = vmatprep.subr.mxu0 0.0
        %303 = vmatpush1.msra.mxu0 0.0
        %304 = vmatprep.subr.mxu0 0.0
        %305 = vmatpush1.msra.mxu0 0.0
        %306 = vmatprep.subr.mxu0 0.0
        %307 = vmatpush1.msra.mxu0 0.0
        %308 = vmatprep.subr.mxu0 0.0
        %309 = vmatpush1.msra.mxu0 0.0
        %310 = vmatprep.subr.mxu0 0.0
        %311 = vmatpush1.msra.mxu0 0.0
        %312 = vmatprep.mubr.f32.mxu0 0.0
        %313 = vmatmul.mubr.f32.gmra.mrb[0].mxu0 %v246
        %v314 = vpop.f32.mrb[0].mxu0
        %v315 = vadd.f32 %v243, %v314
        %v316 = vpop.f32.mrb[0].mxu0
        %317 = vdwg.mxu0
        %318 = vst [vmem:[%s203] sm:$0xff] %v315
        %s319 = sand.u32 %s113, 1
        %s320 = scalar_lea.sflag [#allocation4], %s319
        %s321 = sand.u32 %s113, 1
        %s322 = smul.addr %s321, 8
        %s323 = scalar_lea.vmem [#allocation5], %s322
        // Predicated region
        $region37: #{tpu_custom_call.1} parent=31 // pred_check
          %p324 = pneg %p123
        $region38: #{tpu_custom_call.1} parent=31 // pred_check_branch
          %326 = sbr.rel (%p324) target = $region40
        $region39: #{tpu_custom_call.1} parent=31 // pred_region
          %s328 = ssub.s32 128, 128
          %329 = vsyncadd %s320, %s328
          %s330 = sadd.s32 %s23, %s22
          %s331 = smul.addr %s330, 128
          %s332 = scalar_lea.hbm %s3, %s331
          %s334 = sshll.u32 %s323, 4
          %s335 = int_to_ptr.vmem [resolvable:$true] %s334
          %337 = dma.vmem_to_hbm [thread:$0]  %s335, 128, %s332, %s320
        $region40: #{tpu_custom_call.1} parent=31 // pred_fallthru
          _
      $region32: #{tpu_custom_call.1} parent=5 // pred_fallthru
        _
      %p338 = scmp.le.s32.totalorder 2, %s13
      // Predicated region
      $region41: #{tpu_custom_call.1} parent=5 // pred_check
        %p339 = pneg %p338
      $region42: #{tpu_custom_call.1} parent=5 // pred_check_branch
        %341 = sbr.rel (%p339) target = $region44
      $region43: #{tpu_custom_call.1} parent=5 // pred_region
        %s342 = ssub.s32 %s13, 2
        // Predicated region
        $region45: #{tpu_custom_call.1} parent=43 // pred_check
          %p343 = pneg %p129
        $region46: #{tpu_custom_call.1} parent=43 // pred_check_branch
          %345 = sbr.rel (%p343) target = $region48
        $region47: #{tpu_custom_call.1} parent=43 // pred_region
          %s346 = sand.u32 %s114, 1
          %s347 = scalar_lea.sflag [#allocation4], %s346
          %s348 = sand.u32 %s114, 1
          %s349 = smul.addr %s348, 8
          %s350 = scalar_lea.vmem [#allocation5], %s349
          %351 = dma.done %s347, 128
        $region48: #{tpu_custom_call.1} parent=43 // pred_fallthru
          _
      $region44: #{tpu_custom_call.1} parent=5 // pred_fallthru
        _
    $region6: #{tpu_custom_call.1} parent=1 // loop_footer
      %s17 = sadd.s32 1, %s13
    $region7: #{tpu_custom_call.1} parent=1 // loop_footer_branch
      %12 = sbr.rel target = $region3
    $region8: #{tpu_custom_call.1} parent=1 // loop_exit
      _
    %352 = vsyncpa [#allocation3], 1
    %s353 = scalar_lea.sflag [#allocation3], 1
    %354 = vsyncpa %s353, 1
    %355 = vsyncpa [#allocation4], 1
    %s356 = scalar_lea.sflag [#allocation4], 1
    %357 = vsyncpa %s356, 1

// kernel: tpu_custom_call.1
$region0: #{tpu_custom_call.1}
  #allocation0 [shape = 'u32[]', space=smem, size = 0x4, offset = 0x4, fixed_abs, tag = 'smem constant byte address 0x4 - core index']
  #allocation1 [shape = 'u32[144,128]{1,0:T(1,128)}', space=vmem, size = 0x12000, scoped, tag = 'internal scratch']
  %s0 = inlined_call_operand.vmem [shape: s32[8,2], index: 0, kind: input, shape index: {}]
  %s1 = inlined_call_operand.hbm [shape: f32[64,128], index: 1, kind: input, shape index: {}]
  %s2 = inlined_call_operand.vmem [shape: f32[16,128], index: 2, kind: input, shape index: {}]
  %s3 = inlined_call_operand.hbm [shape: f32[2,8,128], index: 3, kind: output, shape index: {}]
  %s4 = sld [smem:[#allocation0]]
  $region49: #{tpu_custom_call.1} parent=0
    _
  %s6 = ssub.s32 1, %s4
  %s7 = scalar_select 0, %s6, %s4
  $region1: #{tpu_custom_call.1} parent=0
    #allocation2 [shape = 'u8[32768]{0}', space=vmem, size = 0x8000, scoped, tag = 'input window, operand 1, single buffered']
    #allocation3 [shape = 's32[2]{0}', space=sflag, size = 0x8, scoped, tag = 'scoped memory for tpu_custom_call.1']
    #allocation4 [shape = 's32[2]{0}', space=sflag, size = 0x8, scoped, tag = 'scoped memory for tpu_custom_call.1']
    #allocation5 [shape = 'u8[8192]{0}', space=vmem, size = 0x2000, scoped, tag = 'output window, operand 0']
    %8 = vsyncpa [#allocation3], 0
    %9 = vsyncpa [#allocation4], 0
    %s10 = scalar_lea.sflag [#allocation4], 1
    %11 = vsyncpa %s10, 0
    loop: start=0, step=1, limit=4
    $region2: #{tpu_custom_call.1} parent=1 // loop_pre_header
      _
    $region3: #{tpu_custom_call.1} parent=1 // loop_header
      %s13 = sphi 0, %s17
      %p14 = scmp.ge.s32.totalorder %s13, 4
      %s20 = sphi 0, %s32
      %s21 = sphi 0, %s28
      %s22 = sphi 0, %s20
      %s23 = sphi 0, %s21
      %s24 = sphi 0, %s22
      %s25 = sphi 0, %s23
      %s35 = sphi 0, %s37
      %s38 = sphi 0, %s35
      %s39 = sphi 0, %s38
      %s55 = sphi 0, %s39
      %s59 = sphi 0, %s59
      %s61 = sphi 0, %s59
      %s62 = sphi 0, %s61
      %s76 = sphi 0, %s62
      %s82 = sphi 0, %s84
      %s85 = sphi 0, %s82
      %s86 = sphi 0, %s85
      %s102 = sphi 0, %s86
      %s110 = sphi 0, %s112
      %s113 = sphi 0, %s110
      %s114 = sphi 0, %s113
      %s130 = sphi 0, %s114
    $region4: #{tpu_custom_call.1} parent=1 // loop_header_branch
      %16 = sbr.rel (%p14) target = $region8
    $region5: #{tpu_custom_call.1} parent=1 // loop_body
      %s18 = ssub.s32 %s13, 1
      %s19 = ssub.s32 %s13, 2
      %s26 = sadd.s32 1, %s21
      %p27 = scmp.ge.s32.totalorder %s26, 1
      %s28 = scalar_select %p27, 0, %s26
      %s29 = sadd.s32 1, %s20
      %s30 = scalar_select %p27, %s29, %s20
      %p31 = scmp.ge.s32.totalorder %s30, 2
      %s32 = scalar_select %p31, 0, %s30
      %s33 = ssub.s32 %s21, %s28
      %p34 = scmp.eq.s32.totalorder %s33, 0
      %s36 = sadd.s32 %s35, 1
      %s37 = scalar_select %p34, %s35, %s36
      %p40 = pneg %p34
      %p41 = scmp.eq.s32.totalorder %s13, 1
      %p42 = por %p40, %p41
      %p43 = scmp.ne.s32.totalorder %s35, %s38
      %p44 = scmp.eq.s32.totalorder %s13, 0
      %p45 = por %p43, %p44
      %p46 = scmp.ne.s32.totalorder %s35, %s38
      %p47 = scmp.eq.s32.totalorder %s18, 1
      %p48 = por %p46, %p47
      %p49 = scmp.ne.s32.totalorder %s38, %s39
      %p50 = scmp.eq.s32.totalorder %s18, 0
      %p51 = por %p49, %p50
      %p52 = scmp.ne.s32.totalorder %s38, %s39
      %p53 = scmp.eq.s32.totalorder %s19, 1
      %p54 = por %p52, %p53
      %p56 = scmp.ne.s32.totalorder %s39, %s55
      %p57 = scmp.eq.s32.totalorder %s19, 0
      %p58 = por %p56, %p57
      %s60 = sadd.s32 %s59, 1
      %p63 = scmp.eq.s32.totalorder %s13, 1
      %p64 = scmp.ne.s32.totalorder %s59, %s61
      %p65 = scmp.eq.s32.totalorder %s13, 0
      %p66 = por %p64, %p65
      %p67 = scmp.ne.s32.totalorder %s59, %s61
      %p68 = scmp.eq.s32.totalorder %s18, 1
      %p69 = por %p67, %p68
      %p70 = scmp.ne.s32.totalorder %s61, %s62
      %p71 = scmp.eq.s32.totalorder %s18, 0
      %p72 = por %p70, %p71
      %p73 = scmp.ne.s32.totalorder %s61, %s62
      %p74 = scmp.eq.s32.totalorder %s19, 1
      %p75 = por %p73, %p74
      %p77 = scmp.ne.s32.totalorder %s62, %s76
      %p78 = scmp.eq.s32.totalorder %s19, 0
      %p79 = por %p77, %p78
      %s80 = ssub.s32 %s21, %s28
      %p81 = scmp.eq.s32.totalorder %s80, 0
      %s83 = sadd.s32 %s82, 1
      %s84 = scalar_select %p81, %s82, %s83
      %p87 = pneg %p81
      %p88 = scmp.eq.s32.totalorder %s13, 1
      %p89 = por %p87, %p88
      %p90 = scmp.ne.s32.totalorder %s82, %s85
      %p91 = scmp.eq.s32.totalorder %s13, 0
      %p92 = por %p90, %p91
      %p93 = scmp.ne.s32.totalorder %s82, %s85
      %p94 = scmp.eq.s32.totalorder %s18, 1
      %p95 = por %p93, %p94
      %p96 = scmp.ne.s32.totalorder %s85, %s86
      %p97 = scmp.eq.s32.totalorder %s18, 0
      %p98 = por %p96, %p97
      %p99 = scmp.ne.s32.totalorder %s85, %s86
      %p100 = scmp.eq.s32.totalorder %s19, 1
      %p101 = por %p99, %p100
      %p103 = scmp.ne.s32.totalorder %s86, %s102
      %p104 = scmp.eq.s32.totalorder %s19, 0
      %p105 = por %p103, %p104
      %s106 = ssub.s32 %s20, %s32
      %s107 = ssub.s32 %s21, %s28
      %s108 = sor.u32 %s106, %s107
      %p109 = scmp.eq.s32.totalorder %s108, 0
      %s111 = sadd.s32 %s110, 1
      %s112 = scalar_select %p109, %s110, %s111
      %p115 = pneg %p109
      %p116 = scmp.eq.s32.totalorder %s13, 1
      %p117 = por %p115, %p116
      %p118 = scmp.ne.s32.totalorder %s110, %s113
      %p119 = scmp.eq.s32.totalorder %s13, 0
      %p120 = por %p118, %p119
      %p121 = scmp.ne.s32.totalorder %s110, %s113
      %p122 = scmp.eq.s32.totalorder %s18, 1
      %p123 = por %p121, %p122
      %p124 = scmp.ne.s32.totalorder %s113, %s114
      %p125 = scmp.eq.s32.totalorder %s18, 0
      %p126 = por %p124, %p125
      %p127 = scmp.ne.s32.totalorder %s113, %s114
      %p128 = scmp.eq.s32.totalorder %s19, 1
      %p129 = por %p127, %p128
      %p131 = scmp.ne.s32.totalorder %s114, %s130
      %p132 = scmp.eq.s32.totalorder %s19, 0
      %p133 = por %p131, %p132
      %p134 = scmp.le.s32.totalorder 1, %s13
      %p135 = scmp.lt.s32.totalorder %s13, 3
      %p136 = pnand %p134, %p135
      %p137 = pneg %p136
      // Predicated region
      $region9: #{tpu_custom_call.1} parent=5 // pred_check
        _
      $region10: #{tpu_custom_call.1} parent=5 // pred_check_branch
        %139 = sbr.rel (%p136) target = $region12
      $region11: #{tpu_custom_call.1} parent=5 // pred_region
        %s140 = ssub.s32 %s13, 1
        // Predicated region
        $region13: #{tpu_custom_call.1} parent=11 // pred_check
          %p141 = pneg %p51
        $region14: #{tpu_custom_call.1} parent=11 // pred_check_branch
          %143 = sbr.rel (%p141) target = $region16
        $region15: #{tpu_custom_call.1} parent=11 // pred_region
          %p144 = scmp.lt.s32.totalorder %s23, 0
          %s145 = scalar_select %p144, %s23, 0
          %s146 = smul.addr %s145, 8
          %s147 = scalar_lea.vmem %s0, %s146
        $region16: #{tpu_custom_call.1} parent=11 // pred_fallthru
          _
        // Predicated region
        $region17: #{tpu_custom_call.1} parent=11 // pred_check
          %p148 = pneg %p72
        $region18: #{tpu_custom_call.1} parent=11 // pred_check_branch
          %150 = sbr.rel (%p148) target = $region20
        $region19: #{tpu_custom_call.1} parent=11 // pred_region
          %s152 = ssub.s32 1024, 1024
          %153 = vsyncadd [#allocation3], %s152
          %s154 = sshll.u32 [#allocation2], 4
          %s155 = int_to_ptr.vmem [resolvable:$true] %s154
          %160 = dma.hbm_to_vmem [thread:$0]  %s1, 1024, %s155, [#allocation3], 128, 128, 8
        $region20: #{tpu_custom_call.1} parent=11 // pred_fallthru
          _
        // Predicated region
        $region21: #{tpu_custom_call.1} parent=11 // pred_check
          %p161 = pneg %p98
        $region22: #{tpu_custom_call.1} parent=11 // pred_check_branch
          %163 = sbr.rel (%p161) target = $region24
        $region23: #{tpu_custom_call.1} parent=11 // pred_region
          %p164 = scmp.lt.s32.totalorder %s23, 1
          %s165 = scalar_select %p164, %s23, 1
          %s166 = smul.addr %s165, 8
          %s167 = scalar_lea.vmem %s2, %s166
        $region24: #{tpu_custom_call.1} parent=11 // pred_fallthru
          _
      $region12: #{tpu_custom_call.1} parent=5 // pred_fallthru
        _
      %p168 = scmp.lt.s32.totalorder %s13, 2
      // Predicated region
      $region25: #{tpu_custom_call.1} parent=5 // pred_check
        %p169 = pneg %p168
      $region26: #{tpu_custom_call.1} parent=5 // pred_check_branch
        %171 = sbr.rel (%p169) target = $region28
      $region27: #{tpu_custom_call.1} parent=5 // pred_region
        _
      $region28: #{tpu_custom_call.1} parent=5 // pred_fallthru
        _
      %p172 = scmp.le.s32.totalorder 1, %s13
      %p173 = scmp.lt.s32.totalorder %s13, 3
      %p174 = pnand %p172, %p173
      %p175 = pneg %p174
      // Predicated region
      $region29: #{tpu_custom_call.1} parent=5 // pred_check
        _
      $region30: #{tpu_custom_call.1} parent=5 // pred_check_branch
        %177 = sbr.rel (%p174) target = $region32
      $region31: #{tpu_custom_call.1} parent=5 // pred_region
        %s178 = ssub.s32 %s13, 1
        // Predicated region
        $region33: #{tpu_custom_call.1} parent=31 // pred_check
          %p179 = pneg %p72
        $region34: #{tpu_custom_call.1} parent=31 // pred_check_branch
          %181 = sbr.rel (%p179) target = $region36
        $region35: #{tpu_custom_call.1} parent=31 // pred_region
          %182 = dma.done [#allocation3], 1024
        $region36: #{tpu_custom_call.1} parent=31 // pred_fallthru
          _
        %p183 = scmp.lt.s32.totalorder %s23, 0
        %s184 = scalar_select %p183, %s23, 0
        %s185 = smul.addr %s184, 8
        %s186 = scalar_lea.vmem %s0, %s185
        %p187 = pneg %p51
        %p188 = pneg %p48
        %p189 = pneg %p72
        %p190 = pneg %p69
        %p191 = scmp.lt.s32.totalorder %s23, 1
        %s192 = scalar_select %p191, %s23, 1
        %s193 = smul.addr %s192, 8
        %s194 = scalar_lea.vmem %s2, %s193
        %p195 = pneg %p98
        %p196 = pneg %p95
        %p197 = pneg %p126
        %p198 = pneg %p123
        %s199 = sand.u32 %s113, 1
        %s200 = scalar_lea.sflag [#allocation4], %s199
        %s201 = sand.u32 %s113, 1
        %s202 = smul.addr %s201, 8
        %s203 = scalar_lea.vmem [#allocation5], %s202
        %p204 = scmp.lt.s32.totalorder %s23, 0
        %s205 = scalar_select %p204, %s23, 0
        %s206 = smul.addr %s205, 8
        %s207 = scalar_lea.vmem %s0, %s206
        %p208 = scmp.lt.s32.totalorder %s23, 1
        %s209 = scalar_select %p208, %s23, 1
        %s210 = smul.addr %s209, 8
        %s211 = scalar_lea.vmem %s2, %s210
        %v212 = vld [vmem:[%s207] sm:$0xff]
        %v213 = vlaneseq
        %v214 = vand.u32 %v213, 127
        %v215 = vstv %s22
        %vm216 = vcmp.eq.s32.totalorder %v214, %v215
        %v217 = vsel %vm216, %v212, 0
        %vm218 = vcmask 15360
        %v219 = vsel %vm218, %v217, 0
        %v220 = vand.u32 %v219, 65535
        %v221 = vshrl.u32 %v219, 16
        %v222 = vcvt.s32.f32 %v220
        %v223 = vcvt.s32.f32 %v221
        %224 = vadd.xlane.f32.xlu0 %v222
        %v225 = vpop.xlane.xlu0 %224
        %226 = vadd.xlane.f32.xlu0 %v223
        %v227 = vpop.xlane.xlu0 %226
        %v228 = vcvt.f32.s32 %v225
        %v229 = vcvt.f32.s32 %v227
        %v230 = vshll.u32 %v229, 16
        %v231 = vadd.s32 %v230, %v228
        %vm232 = vcmp.eq.s32.totalorder %v231, %v214
        %v233 = vsel %vm232, 1, 0
        %v234 = vcvt.s32.f32 %v233
        %v235 = vld [vmem:[#allocation2] sm:$0xff]
        %v236 = vld [vmem:[#allocation2 + $0x8] sm:$0xff]
        %v237 = vld [vmem:[#allocation2 + $0x10] sm:$0xff]
        %v238 = vld [vmem:[#allocation2 + $0x18] sm:$0xff]
        %v239 = vld [vmem:[#allocation2 + $0x20] sm:$0xff]
        %v240 = vld [vmem:[#allocation2 + $0x28] sm:$0xff]
        %v241 = vld [vmem:[#allocation2 + $0x30] sm:$0xff]
        %v242 = vld [vmem:[#allocation2 + $0x38] sm:$0xff]
        %v243 = vld [vmem:[%s211] sm:$0xff]
        %vm244 = vcmask 523264
        %v246 = vsel %vm244, %v234, 0
        %248 = vmatprep.subr.mxu0 0.0
        %249 = vmatpush1.msra.mxu0 %v235
        %250 = vmatprep.subr.mxu0 0.0
        %251 = vmatpush1.msra.mxu0 %v236
        %252 = vmatprep.subr.mxu0 0.0
        %253 = vmatpush1.msra.mxu0 %v237
        %254 = vmatprep.subr.mxu0 0.0
        %255 = vmatpush1.msra.mxu0 %v238
        %256 = vmatprep.subr.mxu0 0.0
        %257 = vmatpush1.msra.mxu0 %v239
        %258 = vmatprep.subr.mxu0 0.0
        %259 = vmatpush1.msra.mxu0 %v240
        %260 = vmatprep.subr.mxu0 0.0
        %261 = vmatpush1.msra.mxu0 %v241
        %262 = vmatprep.subr.mxu0 0.0
        %263 = vmatpush1.msra.mxu0 %v242
        %264 = vmatprep.subr.mxu0 0.0
        %265 = vmatpush1.msra.mxu0 0.0
        %266 = vmatprep.subr.mxu0 0.0
        %267 = vmatpush1.msra.mxu0 0.0
        %268 = vmatprep.subr.mxu0 0.0
        %269 = vmatpush1.msra.mxu0 0.0
        %270 = vmatprep.subr.mxu0 0.0
        %271 = vmatpush1.msra.mxu0 0.0
        %272 = vmatprep.subr.mxu0 0.0
        %273 = vmatpush1.msra.mxu0 0.0
        %274 = vmatprep.subr.mxu0 0.0
        %275 = vmatpush1.msra.mxu0 0.0
        %276 = vmatprep.subr.mxu0 0.0
        %277 = vmatpush1.msra.mxu0 0.0
        %278 = vmatprep.subr.mxu0 0.0
        %279 = vmatpush1.msra.mxu0 0.0
        %280 = vmatprep.subr.mxu0 0.0
        %281 = vmatpush1.msra.mxu0 0.0
        %282 = vmatprep.subr.mxu0 0.0
        %283 = vmatpush1.msra.mxu0 0.0
        %284 = vmatprep.subr.mxu0 0.0
        %285 = vmatpush1.msra.mxu0 0.0
        %286 = vmatprep.subr.mxu0 0.0
        %287 = vmatpush1.msra.mxu0 0.0
        %288 = vmatprep.subr.mxu0 0.0
        %289 = vmatpush1.msra.mxu0 0.0
        %290 = vmatprep.subr.mxu0 0.0
        %291 = vmatpush1.msra.mxu0 0.0
        %292 = vmatprep.subr.mxu0 0.0
        %293 = vmatpush1.msra.mxu0 0.0
        %294 = vmatprep.subr.mxu0 0.0
        %295 = vmatpush1.msra.mxu0 0.0
        %296 = vmatprep.subr.mxu0 0.0
        %297 = vmatpush1.msra.mxu0 0.0
        %298 = vmatprep.subr.mxu0 0.0
        %299 = vmatpush1.msra.mxu0 0.0
        %300 = vmatprep.subr.mxu0 0.0
        %301 = vmatpush1.msra.mxu0 0.0
        %302 = vmatprep.subr.mxu0 0.0
        %303 = vmatpush1.msra.mxu0 0.0
        %304 = vmatprep.subr.mxu0 0.0
        %305 = vmatpush1.msra.mxu0 0.0
        %306 = vmatprep.subr.mxu0 0.0
        %307 = vmatpush1.msra.mxu0 0.0
        %308 = vmatprep.subr.mxu0 0.0
        %309 = vmatpush1.msra.mxu0 0.0
        %310 = vmatprep.subr.mxu0 0.0
        %311 = vmatpush1.msra.mxu0 0.0
        %312 = vmatprep.mubr.f32.mxu0 0.0
        %313 = vmatmul.mubr.f32.gmra.mrb[0].mxu0 %v246
        %v314 = vpop.f32.mrb[0].mxu0
        %v315 = vadd.f32 %v243, %v314
        %v316 = vpop.f32.mrb[0].mxu0
        %317 = vdwg.mxu0
        %318 = vst [vmem:[%s203] sm:$0xff] %v315
        %s319 = sand.u32 %s113, 1
        %s320 = scalar_lea.sflag [#allocation4], %s319
        %s321 = sand.u32 %s113, 1
        %s322 = smul.addr %s321, 8
        %s323 = scalar_lea.vmem [#allocation5], %s322
        // Predicated region
        $region37: #{tpu_custom_call.1} parent=31 // pred_check
          %p324 = pneg %p123
        $region38: #{tpu_custom_call.1} parent=31 // pred_check_branch
          %326 = sbr.rel (%p324) target = $region40
        $region39: #{tpu_custom_call.1} parent=31 // pred_region
          %s328 = ssub.s32 128, 128
          %329 = vsyncadd %s320, %s328
          %s330 = sadd.s32 %s23, %s22
          %s331 = smul.addr %s330, 128
          %s332 = scalar_lea.hbm %s3, %s331
          %s334 = sshll.u32 %s323, 4
          %s335 = int_to_ptr.vmem [resolvable:$true] %s334
          %337 = dma.vmem_to_hbm [thread:$0]  %s335, 128, %s332, %s320
        $region40: #{tpu_custom_call.1} parent=31 // pred_fallthru
          _
      $region32: #{tpu_custom_call.1} parent=5 // pred_fallthru
        _
      %p338 = scmp.le.s32.totalorder 2, %s13
      // Predicated region
      $region41: #{tpu_custom_call.1} parent=5 // pred_check
        %p339 = pneg %p338
      $region42: #{tpu_custom_call.1} parent=5 // pred_check_branch
        %341 = sbr.rel (%p339) target = $region44
      $region43: #{tpu_custom_call.1} parent=5 // pred_region
        %s342 = ssub.s32 %s13, 2
        // Predicated region
        $region45: #{tpu_custom_call.1} parent=43 // pred_check
          %p343 = pneg %p129
        $region46: #{tpu_custom_call.1} parent=43 // pred_check_branch
          %345 = sbr.rel (%p343) target = $region48
        $region47: #{tpu_custom_call.1} parent=43 // pred_region
          %s346 = sand.u32 %s114, 1
          %s347 = scalar_lea.sflag [#allocation4], %s346
          %s348 = sand.u32 %s114, 1
          %s349 = smul.addr %s348, 8
          %s350 = scalar_lea.vmem [#allocation5], %s349
          %351 = dma.done %s347, 128
        $region48: #{tpu_custom_call.1} parent=43 // pred_fallthru
          _
      $region44: #{tpu_custom_call.1} parent=5 // pred_fallthru
        _
    $region6: #{tpu_custom_call.1} parent=1 // loop_footer
      %s17 = sadd.s32 1, %s13
    $region7: #{tpu_custom_call.1} parent=1 // loop_footer_branch
      %12 = sbr.rel target = $region3
    $region8: #{tpu_custom_call.1} parent=1 // loop_exit
      _
    %352 = vsyncpa [#allocation3], 1
    %s353 = scalar_lea.sflag [#allocation3], 1
    %354 = vsyncpa %s353, 1
    %355 = vsyncpa [#allocation4], 1
    %s356 = scalar_lea.sflag [#allocation4], 1
    %357 = vsyncpa %s356, 1

</llo_original>
